<compile_context>
chip_gen: v5e
topology: v5e:2x2
jax: 0.10.0
libtpu: 0.0.40
codegen_flags: <defaults>
</compile_context>

<pallas_src>
import functools
import math

import jax
import jax.numpy as jnp
from jax import lax
from jax.experimental import pallas as pl
from jax.experimental.pallas import tpu as pltpu


def conv_rowmm_kernel(x_ref, w_ref, b_ref, o_ref):
    # x_ref: (N*H, K)       bf16 row slabs for the whole batch (K = 3*(W+2)*Cin)
    # w_ref: (K, W*Cout)    bf16 conv weights scattered into a dense matmul matrix
    # b_ref: (1, W*Cout)    f32 bias pre-tiled to the lane-dense output pattern
    # o_ref: (N*H, W*Cout)  f32 lane-dense output (W*Cout multiple of 128)
    acc = jnp.dot(x_ref[...], w_ref[...], preferred_element_type=jnp.float32)
    acc = acc + b_ref[...]
    o_ref[...] = jnp.maximum(acc, 0.0).astype(o_ref.dtype)


def build_conv_mm_params(w_oihw, bias, W, compute_dtype=jnp.bfloat16):
    """Precompute the scattered weight matrix M and lane-tiled bias.

    Build once per weight update (outside the jitted forward):
      M[(kh*Wp + (w + kw))*Cin + ci, w*Cout + co] = w[co, ci, kh, kw]
    so that row_slab[h] @ M == conv output row h (kw shift folded into M).
    """
    Cout, Cin, KH, KW = w_oihw.shape
    Wp = W + 2
    K = KH * Wp * Cin
    WC = W * Cout

    w_hwio = jnp.transpose(w_oihw, (2, 3, 1, 0)).astype(jnp.float32)  # (KH,KW,Cin,Cout)
    sel = (jnp.arange(Wp)[None, :, None]
           == jnp.arange(KW)[:, None, None] + jnp.arange(W)[None, None, :])
    sel = sel.astype(jnp.float32)                                     # (KW, Wp, W)
    M = jnp.einsum("kpw,hkio->hpiwo", sel, w_hwio)                    # (KH,Wp,Cin,W,Cout)
    M = M.reshape(K, WC).astype(compute_dtype)

    b_tiled = jnp.tile(bias.astype(jnp.float32), W).reshape(1, WC)    # f32 epilogue add
    return M, b_tiled


def encoder_forward(x_nchw, M, b_tiled, *, cout=16, to_nchw=True,
                    compute_dtype=jnp.bfloat16):
    """relu(conv2d(x, w, b, stride=1, padding=1)) with precomputed M, bias."""
    N, Cin, H, W = x_nchw.shape
    KH = 3
    Wp = W + 2
    K = KH * Wp * Cin
    WC = W * cout
    NH = N * H
    # Lane-dense design requires a full-vreg output row (avoid masked vst).
    assert WC % 128 == 0, f"W*Cout={WC} must be a multiple of 128"

    # ---- wrapper-side layout plumbing (cheap at these sizes) ----
    x_nhwc = jnp.transpose(x_nchw, (0, 2, 3, 1)).astype(compute_dtype)  # (N,H,W,Cin)
    x_pad = jnp.pad(x_nhwc, ((0, 0), (1, 1), (1, 1), (0, 0)))           # (N,H+2,W+2,Cin)

    # Row slabs: slab[n*H + h] = concat of padded rows h, h+1, h+2 -> (N*H, K)
    slabs = jnp.stack([x_pad[:, kh:kh + H] for kh in range(KH)], axis=2)
    slabs = slabs.reshape(NH, K)

    # Single grid step: whole batch in one (NH, K) x (K, WC) MXU pass.
    out = pl.pallas_call(
        conv_rowmm_kernel,
        out_shape=jax.ShapeDtypeStruct((NH, WC), jnp.float32),
        in_specs=[
            pl.BlockSpec((NH, K), lambda: (0, 0)),
            pl.BlockSpec((K, WC), lambda: (0, 0)),
            pl.BlockSpec((1, WC), lambda: (0, 0)),
        ],
        out_specs=pl.BlockSpec((NH, WC), lambda: (0, 0)),
    )(slabs, M, b_tiled)

    out = out.reshape(N, H, W, cout)
    if to_nchw:
        # Kept for parity with the PyTorch module's NCHW output; downstream
        # layers that accept NHWC should pass to_nchw=False and skip this copy.
        out = jnp.transpose(out, (0, 3, 1, 2))
    return out


def init_params(key, cin=3, cout=16, k=3):
    # deterministic init mirroring torch.nn.Conv2d defaults:
    # kaiming_uniform(a=sqrt(5)) => U(-1/sqrt(fan_in), 1/sqrt(fan_in)) for w and b
    kw_key, kb_key = jax.random.split(key)
    fan_in = cin * k * k
    bound = 1.0 / math.sqrt(fan_in)
    w = jax.random.uniform(kw_key, (cout, cin, k, k), jnp.float32, -bound, bound)
    b = jax.random.uniform(kb_key, (cout,), jnp.float32, -bound, bound)
    return w, b


def reference_forward(x_nchw, w_oihw, bias):
    y = lax.conv_general_dilated(
        x_nchw, w_oihw, window_strides=(1, 1), padding=((1, 1), (1, 1)),
        dimension_numbers=("NCHW", "OIHW", "NCHW"))
    return jnp.maximum(y + bias[None, :, None, None], 0.0)


if __name__ == "__main__":
    key = jax.random.PRNGKey(0)
    k_x, k_p = jax.random.split(key)

    N, Cin, H, W = 2, 3, 16, 16
    x = jax.random.normal(k_x, (N, Cin, H, W), jnp.float32)
    w, b = init_params(k_p)

    # Hoisted: build the scattered weight matrix + tiled bias once.
    M, b_tiled = build_conv_mm_params(w, b, W)

    fwd = jax.jit(functools.partial(encoder_forward, cout=16, to_nchw=True))
    out = fwd(x, M, b_tiled)
    out = jax.block_until_ready(out)

    ref = reference_forward(x, w, b)
    assert out.shape == (N, 16, H, W), out.shape
    err = float(jnp.max(jnp.abs(out - ref)))
    # bf16 MXU inputs with f32 accumulation -> loosened tolerance vs f32 path.
    assert jnp.allclose(out, ref, atol=5e-2, rtol=5e-2), err

    print("KERNEL_OK")
</pallas_src>

<mosaic_0001>
module attributes {stable_mosaic.version = 11 : i64} {
  func.func @conv_rowmm_kernel(%arg0: memref<32x162xbf16, #tpu.memory_space<vmem>>, %arg1: memref<162x256xbf16, #tpu.memory_space<vmem>>, %arg2: memref<1x256xf32, #tpu.memory_space<vmem>>, %arg3: memref<32x256xf32, #tpu.memory_space<vmem>>) attributes {dimension_semantics = [], scalar_prefetch = 0 : i64, scratch_operands = 0 : i64, tpu.core_type = #tpu.core_type<tc>} {
    %c0 = arith.constant 0 : index
    %c0_0 = arith.constant 0 : index
    %0 = vector.load %arg0[%c0, %c0_0] : memref<32x162xbf16, #tpu.memory_space<vmem>>, vector<32x162xbf16>
    %c0_1 = arith.constant 0 : index
    %c0_2 = arith.constant 0 : index
    %1 = vector.load %arg1[%c0_1, %c0_2] : memref<162x256xbf16, #tpu.memory_space<vmem>>, vector<162x256xbf16>
    %cst = arith.constant dense<0.000000e+00> : vector<32x256xf32>
    %2 = tpu.matmul %0, %1, %cst {dimension_numbers = #tpu.dot_dimension_numbers<[1], [0], [0], [1], [0, 0, 1, 1], [], []>} : vector<32x162xbf16>, vector<162x256xbf16>, vector<32x256xf32> -> vector<32x256xf32>
    %c0_3 = arith.constant 0 : index
    %c0_4 = arith.constant 0 : index
    %3 = vector.load %arg2[%c0_3, %c0_4] : memref<1x256xf32, #tpu.memory_space<vmem>>, vector<1x256xf32>
    %4 = vector.broadcast %3 : vector<1x256xf32> to vector<32x256xf32>
    %5 = arith.addf %2, %4 : vector<32x256xf32>
    %cst_5 = arith.constant 0.000000e+00 : f32
    %6 = vector.broadcast %cst_5 : f32 to vector<32x256xf32>
    %7 = arith.maximumf %5, %6 : vector<32x256xf32>
    %c0_6 = arith.constant 0 : index
    %c0_7 = arith.constant 0 : index
    %8 = vector.load %arg3[%c0_6, %c0_7] : memref<32x256xf32, #tpu.memory_space<vmem>>, vector<32x256xf32>
    tpu.vector_store %arg3[%c0_6, %c0_7], %7 {strides = array<i32>} : memref<32x256xf32, #tpu.memory_space<vmem>>, vector<32x256xf32>,
    return
  }
}

</mosaic_0001>

<llo_original>
// kernel: encoder_forward.1
$region0: #{encoder_forward.1}
  #allocation0 [shape = 'u32[]', space=smem, size = 0x4, offset = 0x4, fixed_abs, tag = 'smem constant byte address 0x4 - core index']
  #allocation1 [shape = 'u32[72,128]{1,0:T(1,128)}', space=vmem, size = 0x9000, scoped, tag = 'internal scratch']
  %s0 = inlined_call_operand.vmem [shape: bf16[32,162], index: 0, kind: input, shape index: {}]
  %s1 = inlined_call_operand.vmem [shape: bf16[162,256], index: 1, kind: input, shape index: {}]
  %s2 = inlined_call_operand.vmem [shape: f32[1,256], index: 2, kind: input, shape index: {}]
  %s3 = inlined_call_operand.vmem [shape: f32[32,256], index: 3, kind: output, shape index: {}]
  %s4 = sld [smem:[#allocation0]]
  $region22: #{encoder_forward.1} parent=0
    _
  %s6 = ssub.s32 1, %s4
  %s7 = scalar_select 0, %s6, %s4
  // Predicated region
  $region2: #{encoder_forward.1} parent=0 // pred_check
    _
  $region3: #{encoder_forward.1} parent=0 // pred_check_branch
    %9 = sbr.rel (0) target = $region5
  $region4: #{encoder_forward.1} parent=0 // pred_region
    _
  $region5: #{encoder_forward.1} parent=0 // pred_fallthru
    _
  // Predicated region
  $region6: #{encoder_forward.1} parent=0 // pred_check
    _
  $region7: #{encoder_forward.1} parent=0 // pred_check_branch
    %11 = sbr.rel (0) target = $region9
  $region8: #{encoder_forward.1} parent=0 // pred_region
    _
  $region9: #{encoder_forward.1} parent=0 // pred_fallthru
    _
  // Predicated region
  $region10: #{encoder_forward.1} parent=0 // pred_check
    _
  $region11: #{encoder_forward.1} parent=0 // pred_check_branch
    %13 = sbr.rel (0) target = $region13
  $region12: #{encoder_forward.1} parent=0 // pred_region
    _
  $region13: #{encoder_forward.1} parent=0 // pred_fallthru
    _
  %v15 = vld [vmem:[%s0] sm:$0xff]
  %v16 = vld [vmem:[%s0 + $0x8] sm:$0xff]
  %v17 = vld [vmem:[%s0 + $0x10] sm:$0xff]
  %v18 = vld [vmem:[%s0 + $0x18] sm:$0xff]
  %v19 = vld [vmem:[%s1] sm:$0xff]
  %v20 = vld [vmem:[%s1 + $0x8] sm:$0xff]
  %v21 = vld [vmem:[%s1 + $0x10] sm:$0xff]
  %v22 = vld [vmem:[%s1 + $0x18] sm:$0xff]
  %v23 = vld [vmem:[%s1 + $0x20] sm:$0xff]
  %v24 = vld [vmem:[%s1 + $0x28] sm:$0xff]
  %v25 = vld [vmem:[%s1 + $0x30] sm:$0xff]
  %v26 = vld [vmem:[%s1 + $0x38] sm:$0xff]
  %v27 = vld [vmem:[%s1 + $0x40] sm:$0xff]
  %v28 = vld [vmem:[%s1 + $0x48] sm:$0xff]
  %v29 = vld [vmem:[%s1 + $0x50] sm:$0xff]
  %v30 = vld [vmem:[%s1 + $0x58] sm:$0xff]
  %v31 = vld [vmem:[%s1 + $0x60] sm:$0xff]
  %v32 = vld [vmem:[%s1 + $0x68] sm:$0xff]
  %v33 = vld [vmem:[%s1 + $0x70] sm:$0xff]
  %v34 = vld [vmem:[%s1 + $0x78] sm:$0xff]
  %v35 = vld [vmem:[%s1 + $0x80] sm:$0xff]
  %v36 = vld [vmem:[%s1 + $0x88] sm:$0xff]
  %v37 = vld [vmem:[%s1 + $0x90] sm:$0xff]
  %v38 = vld [vmem:[%s1 + $0x98] sm:$0xff]
  %v39 = vld [vmem:[%s1 + $0xa0] sm:$0x11]
  %v40 = vld [vmem:[%s2] sm:$0x3]
  %v42 = vperm.slane %v40, 0
  %v43 = vperm.slane %v40, 1
  %v50 = vunpack.c.l.b16 %v15
  %v51 = vunpack.c.h.b16 %v15
  %v52 = vunpack.c.l.b16 %v16
  %v53 = vunpack.c.h.b16 %v16
  %v54 = vunpack.c.l.b16 %v17
  %v55 = vunpack.c.h.b16 %v17
  %v56 = vunpack.c.l.b16 %v18
  %v57 = vunpack.c.h.b16 %v18
  %v58 = vpack.c.b16 %v52, %v50
  %v59 = vpack.c.b16 %v53, %v51
  %v60 = vpack.c.b16 %v56, %v54
  %v61 = vpack.c.b16 %v57, %v55
  %v85 = vunpack.c.l.b16 %v19
  %v86 = vunpack.c.h.b16 %v19
  %v87 = vunpack.c.l.b16 %v20
  %v88 = vunpack.c.h.b16 %v20
  %v89 = vunpack.c.l.b16 %v21
  %v90 = vunpack.c.h.b16 %v21
  %v91 = vunpack.c.l.b16 %v22
  %v92 = vunpack.c.h.b16 %v22
  %v93 = vunpack.c.l.b16 %v23
  %v94 = vunpack.c.h.b16 %v23
  %v95 = vunpack.c.l.b16 %v24
  %v96 = vunpack.c.h.b16 %v24
  %v97 = vunpack.c.l.b16 %v25
  %v98 = vunpack.c.h.b16 %v25
  %v99 = vunpack.c.l.b16 %v26
  %v100 = vunpack.c.h.b16 %v26
  %v101 = vunpack.c.l.b16 %v27
  %v102 = vunpack.c.h.b16 %v27
  %v103 = vunpack.c.l.b16 %v28
  %v104 = vunpack.c.h.b16 %v28
  %v105 = vunpack.c.l.b16 %v29
  %v106 = vunpack.c.h.b16 %v29
  %v107 = vunpack.c.l.b16 %v30
  %v108 = vunpack.c.h.b16 %v30
  %v109 = vunpack.c.l.b16 %v31
  %v110 = vunpack.c.h.b16 %v31
  %v111 = vunpack.c.l.b16 %v32
  %v112 = vunpack.c.h.b16 %v32
  %v113 = vunpack.c.l.b16 %v33
  %v114 = vunpack.c.h.b16 %v33
  %v115 = vunpack.c.l.b16 %v34
  %v116 = vunpack.c.h.b16 %v34
  %v117 = vunpack.c.l.b16 %v35
  %v118 = vunpack.c.h.b16 %v35
  %v119 = vunpack.c.l.b16 %v36
  %v120 = vunpack.c.h.b16 %v36
  %v121 = vunpack.c.l.b16 %v37
  %v122 = vunpack.c.h.b16 %v37
  %v123 = vunpack.c.l.b16 %v38
  %v124 = vunpack.c.h.b16 %v38
  %v125 = vunpack.c.l.b16 %v39
  %v126 = vunpack.c.h.b16 %v39
  %v127 = vpack.c.b16 %v87, %v85
  %v128 = vpack.c.b16 %v88, %v86
  %v129 = vpack.c.b16 %v91, %v89
  %v130 = vpack.c.b16 %v92, %v90
  %v131 = vpack.c.b16 %v95, %v93
  %v132 = vpack.c.b16 %v96, %v94
  %v133 = vpack.c.b16 %v99, %v97
  %v134 = vpack.c.b16 %v100, %v98
  %v135 = vpack.c.b16 %v103, %v101
  %v136 = vpack.c.b16 %v104, %v102
  %v137 = vpack.c.b16 %v107, %v105
  %v138 = vpack.c.b16 %v108, %v106
  %v139 = vpack.c.b16 %v111, %v109
  %v140 = vpack.c.b16 %v112, %v110
  %v141 = vpack.c.b16 %v115, %v113
  %v142 = vpack.c.b16 %v116, %v114
  %v143 = vpack.c.b16 %v119, %v117
  %v144 = vpack.c.b16 %v120, %v118
  %v145 = vpack.c.b16 %v123, %v121
  %v146 = vpack.c.b16 %v124, %v122
  %v147 = vpack.c.b16 %v125, %v125
  %v148 = vpack.c.b16 %v126, %v126
  %vm169 = vcmask 277504
  %v171 = vsel %vm169, %v59, 0
  %v174 = vsel %vm169, %v61, 0
  %vm176 = vcmask 1040384
  %v178 = vsel %vm176, %v147, 0
  %v181 = vsel %vm176, %v148, 0
  %183 = vmatpush.bf16.msra.mxu0 %v141
  %184 = vmatpush.bf16.msra.mxu0 %v139
  %185 = vmatpush.bf16.msra.mxu0 %v137
  %186 = vmatpush.bf16.msra.mxu0 %v135
  %187 = vmatpush.bf16.msra.mxu0 %v133
  %188 = vmatpush.bf16.msra.mxu0 %v131
  %189 = vmatpush.bf16.msra.mxu0 %v129
  %190 = vmatpush.bf16.msra.mxu0 %v127
  %191 = vmatmul.bf16.gmra.mxu0 %v58
  %v192 = vpop.f32.mrf.mxu0
  %v193 = vadd.f32 %v42, %v192
  %v194 = vpop.f32.mrf.mxu0
  %v195 = vadd.f32 %v42, %v194
  %196 = vmatmul.bf16.gmra.mxu0 %v60
  %v197 = vpop.f32.mrf.mxu0
  %v198 = vadd.f32 %v42, %v197
  %v199 = vpop.f32.mrf.mxu0
  %v200 = vadd.f32 %v42, %v199
  %201 = vdwg.mxu0
  %202 = vmatpush.bf16.msra.mxu0 0
  %203 = vmatpush.bf16.msra.mxu0 0
  %204 = vmatpush.bf16.msra.mxu0 0
  %205 = vmatpush.bf16.msra.mxu0 0
  %206 = vmatpush.bf16.msra.mxu0 0
  %207 = vmatpush.bf16.msra.mxu0 %v178
  %208 = vmatpush.bf16.msra.mxu0 %v145
  %209 = vmatpush.bf16.msra.mxu0 %v143
  %210 = vmatmul.bf16.gmra.mxu0 %v171
  %v211 = vpop.f32.mrf.mxu0
  %v212 = vadd.f32 %v193, %v211
  %v213 = vpop.f32.mrf.mxu0
  %v214 = vadd.f32 %v195, %v213
  %215 = vmatmul.bf16.gmra.mxu0 %v174
  %v216 = vpop.f32.mrf.mxu0
  %v217 = vadd.f32 %v198, %v216
  %v218 = vpop.f32.mrf.mxu0
  %v219 = vadd.f32 %v200, %v218
  %220 = vdwg.mxu0
  %221 = vmatpush.bf16.msra.mxu0 %v142
  %222 = vmatpush.bf16.msra.mxu0 %v140
  %223 = vmatpush.bf16.msra.mxu0 %v138
  %224 = vmatpush.bf16.msra.mxu0 %v136
  %225 = vmatpush.bf16.msra.mxu0 %v134
  %226 = vmatpush.bf16.msra.mxu0 %v132
  %227 = vmatpush.bf16.msra.mxu0 %v130
  %228 = vmatpush.bf16.msra.mxu0 %v128
  %229 = vmatmul.bf16.gmra.mxu0 %v58
  %v230 = vpop.f32.mrf.mxu0
  %v231 = vadd.f32 %v43, %v230
  %v232 = vpop.f32.mrf.mxu0
  %v233 = vadd.f32 %v43, %v232
  %234 = vmatmul.bf16.gmra.mxu0 %v60
  %v235 = vpop.f32.mrf.mxu0
  %v236 = vadd.f32 %v43, %v235
  %v237 = vpop.f32.mrf.mxu0
  %v238 = vadd.f32 %v43, %v237
  %239 = vdwg.mxu0
  %240 = vmatpush.bf16.msra.mxu0 0
  %241 = vmatpush.bf16.msra.mxu0 0
  %242 = vmatpush.bf16.msra.mxu0 0
  %243 = vmatpush.bf16.msra.mxu0 0
  %244 = vmatpush.bf16.msra.mxu0 0
  %245 = vmatpush.bf16.msra.mxu0 %v181
  %246 = vmatpush.bf16.msra.mxu0 %v146
  %247 = vmatpush.bf16.msra.mxu0 %v144
  %248 = vmatmul.bf16.gmra.mxu0 %v171
  %v249 = vpop.f32.mrf.mxu0
  %v250 = vadd.f32 %v231, %v249
  %v251 = vpop.f32.mrf.mxu0
  %v252 = vadd.f32 %v233, %v251
  %253 = vmatmul.bf16.gmra.mxu0 %v174
  %v254 = vpop.f32.mrf.mxu0
  %v255 = vadd.f32 %v236, %v254
  %v256 = vpop.f32.mrf.mxu0
  %v257 = vadd.f32 %v238, %v256
  %258 = vdwg.mxu0
  %v259 = vmax.f32 %v212, 0.0
  %v260 = vmax.f32 %v250, 0.0
  %v261 = vmax.f32 %v214, 0.0
  %v262 = vmax.f32 %v252, 0.0
  %v263 = vmax.f32 %v217, 0.0
  %v264 = vmax.f32 %v255, 0.0
  %v265 = vmax.f32 %v219, 0.0
  %v266 = vmax.f32 %v257, 0.0
  %267 = vst [vmem:[%s3] sm:$0xff] %v259
  %268 = vst [vmem:[%s3 + $0x8] sm:$0xff] %v260
  %269 = vst [vmem:[%s3 + $0x10] sm:$0xff] %v261
  %270 = vst [vmem:[%s3 + $0x18] sm:$0xff] %v262
  %271 = vst [vmem:[%s3 + $0x20] sm:$0xff] %v263
  %272 = vst [vmem:[%s3 + $0x28] sm:$0xff] %v264
  %273 = vst [vmem:[%s3 + $0x30] sm:$0xff] %v265
  %274 = vst [vmem:[%s3 + $0x38] sm:$0xff] %v266
  // Predicated region
  $region14: #{encoder_forward.1} parent=0 // pred_check
    _
  $region15: #{encoder_forward.1} parent=0 // pred_check_branch
    %276 = sbr.rel (0) target = $region17
  $region16: #{encoder_forward.1} parent=0 // pred_region
    _
  $region17: #{encoder_forward.1} parent=0 // pred_fallthru
    _
  // Predicated region
  $region18: #{encoder_forward.1} parent=0 // pred_check
    _
  $region19: #{encoder_forward.1} parent=0 // pred_check_branch
    %278 = sbr.rel (0) target = $region21
  $region20: #{encoder_forward.1} parent=0 // pred_region
    _
  $region21: #{encoder_forward.1} parent=0 // pred_fallthru
    _

</llo_original>
